<compile_context>
chip_gen: v6e
topology: v6e:2x2x1
jax: 0.10.0
libtpu: 0.0.40
codegen_flags: <defaults>
</compile_context>

<pallas_src>
import functools
import math

import jax
import jax.numpy as jnp
from jax import lax
from jax.experimental import pallas as pl
from jax.experimental.pallas import tpu as pltpu


def _cluster_loss_kernel(ci_ref, cj_ref, out_ref, *, class_num, temperature,
                         log_c, use_const_shift):
    ci = ci_ref[...].astype(jnp.float32)          # (B, C)
    cj = cj_ref[...].astype(jnp.float32)          # (B, C)
    C = class_num
    N = 2 * C
    inv_t = jnp.float32(1.0 / temperature)

    # --- entropy regularizer (ne_loss) ----------------------------------
    # NOTE: p * log(p) NaNs for exactly-zero cluster mass, matching PyTorch.
    p_i = jnp.sum(ci, axis=0, keepdims=True)      # (1, C)
    p_i = p_i / jnp.sum(p_i)
    ne_i = log_c + jnp.sum(p_i * jnp.log(p_i))
    p_j = jnp.sum(cj, axis=0, keepdims=True)      # (1, C)
    p_j = p_j / jnp.sum(p_j)
    ne_j = log_c + jnp.sum(p_j * jnp.log(p_j))

    # --- per-cluster L2 normalization (cosine similarity prep) ----------
    ni = jnp.sqrt(jnp.sum(ci * ci, axis=0, keepdims=True))       # (1, C)
    cni = ci / jnp.maximum(ni, 1e-8)                             # (B, C)
    nj = jnp.sqrt(jnp.sum(cj * cj, axis=0, keepdims=True))
    cnj = cj / jnp.maximum(nj, 1e-8)                             # (B, C)

    # --- positives: sum_k sim[k, pos(k)] = 2/T * <cni, cnj> -------------
    pos_total = 2.0 * inv_t * jnp.sum(cni * cnj)

    # --- similarity blocks on the MXU (transpose folded into dot) -------
    # sim = [[A, Bm], [Bm^T, D]] / T  with columns of cni/cnj normalized.
    dn = (((0,), (0,)), ((), ()))                 # contract batch dim of both

    def mm(a, b):
        return lax.dot_general(a, b, dn,
                               preferred_element_type=jnp.float32) * inv_t

    A = mm(cni, cni)                                             # (C, C)
    Bm = mm(cni, cnj)                                            # (C, C)
    D = mm(cnj, cnj)                                             # (C, C)

    # Diagonal mask from tiny (C,1) x (1,C) iota compare.
    row = lax.broadcasted_iota(jnp.int32, (C, 1), 0)
    col = lax.broadcasted_iota(jnp.int32, (1, C), 1)
    is_diag = row == col                                         # (C, C) bool

    if use_const_shift:
        # Constant shift: logits <= 1/T, so exp(x - 1/T) <= 1 (no overflow).
        shift = inv_t
        eA = jnp.where(is_diag, 0.0, jnp.exp(A - shift))
        eB = jnp.exp(Bm - shift)
        eD = jnp.where(is_diag, 0.0, jnp.exp(D - shift))
        # First-half rows: [A (no diag) | Bm]  -> row sums.
        s1 = (jnp.sum(eA, axis=1, keepdims=True) +
              jnp.sum(eB, axis=1, keepdims=True))                # (C, 1)
        # Second-half rows: [Bm^T | D (no diag)] -> column sums of eB plus
        # column sums of eD (== row sums, D is symmetric).
        s2 = (jnp.sum(eB, axis=0, keepdims=True) +
              jnp.sum(eD, axis=0, keepdims=True))                # (1, C)
        lse_total = N * shift + jnp.sum(jnp.log(s1)) + jnp.sum(jnp.log(s2))
    else:
        # Fallback masked-max LSE for very small temperature (T < ~0.03)
        # where exp(-2/T) would underflow f32.
        neg_big = jnp.float32(-1e30)
        A_nd = jnp.where(is_diag, neg_big, A)
        D_nd = jnp.where(is_diag, neg_big, D)
        m1 = jnp.maximum(jnp.max(A_nd, axis=1, keepdims=True),
                         jnp.max(Bm, axis=1, keepdims=True))     # (C, 1)
        s1 = (jnp.sum(jnp.exp(A_nd - m1), axis=1, keepdims=True) +
              jnp.sum(jnp.exp(Bm - m1), axis=1, keepdims=True))
        lse1 = m1 + jnp.log(s1)
        m2 = jnp.maximum(jnp.max(Bm, axis=0, keepdims=True),
                         jnp.max(D_nd, axis=0, keepdims=True))   # (1, C)
        s2 = (jnp.sum(jnp.exp(Bm - m2), axis=0, keepdims=True) +
              jnp.sum(jnp.exp(D_nd - m2), axis=0, keepdims=True))
        lse2 = m2 + jnp.log(s2)
        lse_total = jnp.sum(lse1) + jnp.sum(lse2)

    loss = (lse_total - pos_total) / N + ne_i + ne_j
    out_ref[0] = loss


def cluster_loss(c_i, c_j, class_num, temperature):
    B, C = c_i.shape
    assert C == class_num and c_j.shape == (B, C)
    # Constant-shift LSE is valid whenever exp(-2/T) is representable in f32.
    use_const_shift = float(temperature) >= 0.03
    kernel = functools.partial(
        _cluster_loss_kernel,
        class_num=class_num,
        temperature=float(temperature),
        log_c=float(math.log(class_num)),
        use_const_shift=use_const_shift,
    )
    out = pl.pallas_call(
        kernel,
        out_shape=jax.ShapeDtypeStruct((1,), jnp.float32),
        in_specs=[pl.BlockSpec(memory_space=pltpu.MemorySpace.VMEM),
                  pl.BlockSpec(memory_space=pltpu.MemorySpace.VMEM)],
        out_specs=pl.BlockSpec(memory_space=pltpu.MemorySpace.SMEM),
        compiler_params=pltpu.CompilerParams(
            vmem_limit_bytes=48 * 1024 * 1024),
    )(c_i, c_j)
    return out[0]


def cluster_loss_ref(c_i, c_j, class_num, temperature):
    """Pure-JAX reference mirroring the PyTorch forward."""
    p_i = c_i.sum(0)
    p_i = p_i / p_i.sum()
    ne_i = math.log(class_num) + (p_i * jnp.log(p_i)).sum()
    p_j = c_j.sum(0)
    p_j = p_j / p_j.sum()
    ne_j = math.log(class_num) + (p_j * jnp.log(p_j)).sum()

    N = 2 * class_num
    c = jnp.concatenate([c_i.T, c_j.T], axis=0)
    cn = c / jnp.linalg.norm(c, axis=1, keepdims=True)
    sim = (cn @ cn.T) / temperature
    pos = jnp.concatenate([jnp.diag(sim, class_num), jnp.diag(sim, -class_num)])
    sim_nodiag = jnp.where(jnp.eye(N, dtype=bool), -jnp.inf, sim)
    lse = jax.scipy.special.logsumexp(sim_nodiag, axis=1)
    loss = jnp.sum(lse - pos) / N
    return loss + ne_i + ne_j


if __name__ == "__main__":
    class_num = 16
    batch = 8
    temperature = 0.5

    key = jax.random.PRNGKey(0)
    k1, k2 = jax.random.split(key)
    # Cluster assignment probabilities (softmax over class dim), as the model emits.
    c_i = jax.nn.softmax(jax.random.normal(k1, (batch, class_num), jnp.float32), axis=1)
    c_j = jax.nn.softmax(jax.random.normal(k2, (batch, class_num), jnp.float32), axis=1)

    out = cluster_loss(c_i, c_j, class_num, temperature)
    out = jax.block_until_ready(out)

    ref = cluster_loss_ref(c_i, c_j, class_num, temperature)
    assert jnp.allclose(out, ref, rtol=1e-3, atol=1e-3), (out, ref)

    print("KERNEL_OK")
</pallas_src>

<mosaic_0001>
module attributes {stable_mosaic.version = 11 : i64} {
  func.func @_cluster_loss_kernel(%arg0: memref<8x16xf32, #tpu.memory_space<vmem>>, %arg1: memref<8x16xf32, #tpu.memory_space<vmem>>, %arg2: memref<1xf32, #tpu.memory_space<smem>>) attributes {dimension_semantics = [], scalar_prefetch = 0 : i64, scratch_operands = 0 : i64, tpu.core_type = #tpu.core_type<tc>} {
    %c0 = arith.constant 0 : index
    %c0_0 = arith.constant 0 : index
    %0 = vector.load %arg0[%c0, %c0_0] : memref<8x16xf32, #tpu.memory_space<vmem>>, vector<8x16xf32>
    %c0_1 = arith.constant 0 : index
    %c0_2 = arith.constant 0 : index
    %1 = vector.load %arg1[%c0_1, %c0_2] : memref<8x16xf32, #tpu.memory_space<vmem>>, vector<8x16xf32>
    %cst = arith.constant dense<0.000000e+00> : vector<16xf32>
    %2 = vector.multi_reduction <add>, %0, %cst [0] : vector<8x16xf32> to vector<16xf32>
    %3 = vector.shape_cast %2 : vector<16xf32> to vector<1x16xf32>
    %4 = vector.shape_cast %3 : vector<1x16xf32> to vector<1x1x16xf32>
    %cst_3 = arith.constant dense<0.000000e+00> : vector<1xf32>
    %5 = vector.multi_reduction <add>, %4, %cst_3 [1, 2] : vector<1x1x16xf32> to vector<1xf32>
    %6 = vector.shape_cast %5 : vector<1xf32> to vector<1x1x1xf32>
    %7 = vector.extract %6[0, 0, 0] : f32 from vector<1x1x1xf32>
    %8 = vector.broadcast %7 : f32 to vector<1x16xf32>
    %9 = arith.divf %3, %8 : vector<1x16xf32>
    %10 = math.log %9 : vector<1x16xf32>
    %11 = arith.mulf %9, %10 : vector<1x16xf32>
    %12 = vector.shape_cast %11 : vector<1x16xf32> to vector<1x1x16xf32>
    %cst_4 = arith.constant dense<0.000000e+00> : vector<1xf32>
    %13 = vector.multi_reduction <add>, %12, %cst_4 [1, 2] : vector<1x1x16xf32> to vector<1xf32>
    %14 = vector.shape_cast %13 : vector<1xf32> to vector<1x1x1xf32>
    %15 = vector.extract %14[0, 0, 0] : f32 from vector<1x1x1xf32>
    %cst_5 = arith.constant 2.77258873 : f32
    %16 = arith.addf %cst_5, %15 : f32
    %cst_6 = arith.constant dense<0.000000e+00> : vector<16xf32>
    %17 = vector.multi_reduction <add>, %1, %cst_6 [0] : vector<8x16xf32> to vector<16xf32>
    %18 = vector.shape_cast %17 : vector<16xf32> to vector<1x16xf32>
    %19 = vector.shape_cast %18 : vector<1x16xf32> to vector<1x1x16xf32>
    %cst_7 = arith.constant dense<0.000000e+00> : vector<1xf32>
    %20 = vector.multi_reduction <add>, %19, %cst_7 [1, 2] : vector<1x1x16xf32> to vector<1xf32>
    %21 = vector.shape_cast %20 : vector<1xf32> to vector<1x1x1xf32>
    %22 = vector.extract %21[0, 0, 0] : f32 from vector<1x1x1xf32>
    %23 = vector.broadcast %22 : f32 to vector<1x16xf32>
    %24 = arith.divf %18, %23 : vector<1x16xf32>
    %25 = math.log %24 : vector<1x16xf32>
    %26 = arith.mulf %24, %25 : vector<1x16xf32>
    %27 = vector.shape_cast %26 : vector<1x16xf32> to vector<1x1x16xf32>
    %cst_8 = arith.constant dense<0.000000e+00> : vector<1xf32>
    %28 = vector.multi_reduction <add>, %27, %cst_8 [1, 2] : vector<1x1x16xf32> to vector<1xf32>
    %29 = vector.shape_cast %28 : vector<1xf32> to vector<1x1x1xf32>
    %30 = vector.extract %29[0, 0, 0] : f32 from vector<1x1x1xf32>
    %cst_9 = arith.constant 2.77258873 : f32
    %31 = arith.addf %cst_9, %30 : f32
    %32 = arith.mulf %0, %0 : vector<8x16xf32>
    %cst_10 = arith.constant dense<0.000000e+00> : vector<16xf32>
    %33 = vector.multi_reduction <add>, %32, %cst_10 [0] : vector<8x16xf32> to vector<16xf32>
    %34 = vector.shape_cast %33 : vector<16xf32> to vector<1x16xf32>
    %35 = math.sqrt %34 : vector<1x16xf32>
    %cst_11 = arith.constant 9.99999993E-9 : f32
    %36 = vector.broadcast %cst_11 : f32 to vector<1x16xf32>
    %37 = arith.maximumf %35, %36 : vector<1x16xf32>
    %38 = vector.broadcast %37 : vector<1x16xf32> to vector<8x16xf32>
    %39 = arith.divf %0, %38 : vector<8x16xf32>
    %40 = arith.mulf %1, %1 : vector<8x16xf32>
    %cst_12 = arith.constant dense<0.000000e+00> : vector<16xf32>
    %41 = vector.multi_reduction <add>, %40, %cst_12 [0] : vector<8x16xf32> to vector<16xf32>
    %42 = vector.shape_cast %41 : vector<16xf32> to vector<1x16xf32>
    %43 = math.sqrt %42 : vector<1x16xf32>
    %cst_13 = arith.constant 9.99999993E-9 : f32
    %44 = vector.broadcast %cst_13 : f32 to vector<1x16xf32>
    %45 = arith.maximumf %43, %44 : vector<1x16xf32>
    %46 = vector.broadcast %45 : vector<1x16xf32> to vector<8x16xf32>
    %47 = arith.divf %1, %46 : vector<8x16xf32>
    %cst_14 = arith.constant 2.000000e+00 : f32
    %cst_15 = arith.constant 2.000000e+00 : f32
    %48 = arith.mulf %cst_14, %cst_15 : f32
    %49 = arith.mulf %39, %47 : vector<8x16xf32>
    %50 = vector.shape_cast %49 : vector<8x16xf32> to vector<1x8x16xf32>
    %cst_16 = arith.constant dense<0.000000e+00> : vector<1xf32>
    %51 = vector.multi_reduction <add>, %50, %cst_16 [1, 2] : vector<1x8x16xf32> to vector<1xf32>
    %52 = vector.shape_cast %51 : vector<1xf32> to vector<1x1x1xf32>
    %53 = vector.extract %52[0, 0, 0] : f32 from vector<1x1x1xf32>
    %54 = arith.mulf %48, %53 : f32
    %cst_17 = arith.constant dense<0.000000e+00> : vector<16x16xf32>
    %55 = tpu.matmul %39, %39, %cst_17 {dimension_numbers = #tpu.dot_dimension_numbers<[0], [0], [1], [1], [0, 1, 1, 1], [], []>} : vector<8x16xf32>, vector<8x16xf32>, vector<16x16xf32> -> vector<16x16xf32>
    %cst_18 = arith.constant 2.000000e+00 : f32
    %56 = vector.broadcast %cst_18 : f32 to vector<16x16xf32>
    %57 = arith.mulf %55, %56 : vector<16x16xf32>
    %cst_19 = arith.constant dense<0.000000e+00> : vector<16x16xf32>
    %58 = tpu.matmul %39, %47, %cst_19 {dimension_numbers = #tpu.dot_dimension_numbers<[0], [0], [1], [1], [0, 1, 1, 1], [], []>} : vector<8x16xf32>, vector<8x16xf32>, vector<16x16xf32> -> vector<16x16xf32>
    %cst_20 = arith.constant 2.000000e+00 : f32
    %59 = vector.broadcast %cst_20 : f32 to vector<16x16xf32>
    %60 = arith.mulf %58, %59 : vector<16x16xf32>
    %cst_21 = arith.constant dense<0.000000e+00> : vector<16x16xf32>
    %61 = tpu.matmul %47, %47, %cst_21 {dimension_numbers = #tpu.dot_dimension_numbers<[0], [0], [1], [1], [0, 1, 1, 1], [], []>} : vector<8x16xf32>, vector<8x16xf32>, vector<16x16xf32> -> vector<16x16xf32>
    %cst_22 = arith.constant 2.000000e+00 : f32
    %62 = vector.broadcast %cst_22 : f32 to vector<16x16xf32>
    %63 = arith.mulf %61, %62 : vector<16x16xf32>
    %64 = tpu.iota {dimensions = array<i32: 0>} : vector<16x1xi32>
    %65 = tpu.iota {dimensions = array<i32: 1>} : vector<1x16xi32>
    %66 = vector.broadcast %64 : vector<16x1xi32> to vector<16x16xi32>
    %67 = vector.broadcast %65 : vector<1x16xi32> to vector<16x16xi32>
    %68 = arith.cmpi eq, %66, %67 : vector<16x16xi32>
    %cst_23 = arith.constant 2.000000e+00 : f32
    %69 = vector.broadcast %cst_23 : f32 to vector<16x16xf32>
    %70 = arith.subf %57, %69 : vector<16x16xf32>
    %71 = math.exp %70 : vector<16x16xf32>
    %cst_24 = arith.constant 0.000000e+00 : f32
    %72 = vector.broadcast %cst_24 : f32 to vector<16x16xf32>
    %73 = arith.select %68, %72, %71 : vector<16x16xi1>, vector<16x16xf32>
    %cst_25 = arith.constant 2.000000e+00 : f32
    %74 = vector.broadcast %cst_25 : f32 to vector<16x16xf32>
    %75 = arith.subf %60, %74 : vector<16x16xf32>
    %76 = math.exp %75 : vector<16x16xf32>
    %cst_26 = arith.constant 2.000000e+00 : f32
    %77 = vector.broadcast %cst_26 : f32 to vector<16x16xf32>
    %78 = arith.subf %63, %77 : vector<16x16xf32>
    %79 = math.exp %78 : vector<16x16xf32>
    %cst_27 = arith.constant 0.000000e+00 : f32
    %80 = vector.broadcast %cst_27 : f32 to vector<16x16xf32>
    %81 = arith.select %68, %80, %79 : vector<16x16xi1>, vector<16x16xf32>
    %cst_28 = arith.constant dense<0.000000e+00> : vector<16xf32>
    %82 = vector.multi_reduction <add>, %73, %cst_28 [1] : vector<16x16xf32> to vector<16xf32>
    %83 = vector.shape_cast %82 : vector<16xf32> to vector<16x1xf32>
    %cst_29 = arith.constant dense<0.000000e+00> : vector<16xf32>
    %84 = vector.multi_reduction <add>, %76, %cst_29 [1] : vector<16x16xf32> to vector<16xf32>
    %85 = vector.shape_cast %84 : vector<16xf32> to vector<16x1xf32>
    %86 = arith.addf %83, %85 : vector<16x1xf32>
    %cst_30 = arith.constant dense<0.000000e+00> : vector<16xf32>
    %87 = vector.multi_reduction <add>, %76, %cst_30 [0] : vector<16x16xf32> to vector<16xf32>
    %88 = vector.shape_cast %87 : vector<16xf32> to vector<1x16xf32>
    %cst_31 = arith.constant dense<0.000000e+00> : vector<16xf32>
    %89 = vector.multi_reduction <add>, %81, %cst_31 [0] : vector<16x16xf32> to vector<16xf32>
    %90 = vector.shape_cast %89 : vector<16xf32> to vector<1x16xf32>
    %91 = arith.addf %88, %90 : vector<1x16xf32>
    %cst_32 = arith.constant 3.200000e+01 : f32
    %cst_33 = arith.constant 2.000000e+00 : f32
    %92 = arith.mulf %cst_32, %cst_33 : f32
    %93 = math.log %86 : vector<16x1xf32>
    %94 = vector.shape_cast %93 : vector<16x1xf32> to vector<1x16x1xf32>
    %cst_34 = arith.constant dense<0.000000e+00> : vector<1xf32>
    %95 = vector.multi_reduction <add>, %94, %cst_34 [1, 2] : vector<1x16x1xf32> to vector<1xf32>
    %96 = vector.shape_cast %95 : vector<1xf32> to vector<1x1x1xf32>
    %97 = vector.extract %96[0, 0, 0] : f32 from vector<1x1x1xf32>
    %98 = arith.addf %92, %97 : f32
    %99 = math.log %91 : vector<1x16xf32>
    %100 = vector.shape_cast %99 : vector<1x16xf32> to vector<1x1x16xf32>
    %cst_35 = arith.constant dense<0.000000e+00> : vector<1xf32>
    %101 = vector.multi_reduction <add>, %100, %cst_35 [1, 2] : vector<1x1x16xf32> to vector<1xf32>
    %102 = vector.shape_cast %101 : vector<1xf32> to vector<1x1x1xf32>
    %103 = vector.extract %102[0, 0, 0] : f32 from vector<1x1x1xf32>
    %104 = arith.addf %98, %103 : f32
    %105 = arith.subf %104, %54 : f32
    %cst_36 = arith.constant 3.200000e+01 : f32
    %106 = arith.divf %105, %cst_36 : f32
    %107 = arith.addf %106, %16 : f32
    %108 = arith.addf %107, %31 : f32
    %c0_37 = arith.constant 0 : index
    %109 = memref.load %arg2[%c0_37] : memref<1xf32, #tpu.memory_space<smem>>
    memref.store %108, %arg2[%c0_37] : memref<1xf32, #tpu.memory_space<smem>>
    return
  }
}

</mosaic_0001>

<llo_original>
// kernel: tpu_custom_call.1
$region0: #{tpu_custom_call.1}
  #allocation0 [shape = 'u32[]', space=smem, size = 0x4, offset = 0x4, fixed_abs, tag = 'smem constant byte address 0x4 - core index']
  #allocation1 [shape = 'u32[144,128]{1,0:T(1,128)}', space=vmem, size = 0x12000, scoped, tag = 'internal scratch']
  %s0 = inlined_call_operand.hbm [shape: f32[8,16], index: 0, kind: input, shape index: {}]
  %s1 = inlined_call_operand.hbm [shape: f32[8,16], index: 1, kind: input, shape index: {}]
  %s2 = inlined_call_operand.hbm [shape: f32[1], index: 2, kind: output, shape index: {}]
  %s3 = sld [smem:[#allocation0]]
  $region26: #{tpu_custom_call.1} parent=0
    _
  %s5 = ssub.s32 1, %s3
  %s6 = scalar_select 0, %s5, %s3
  $region1: #{tpu_custom_call.1} parent=0
    #allocation2 [shape = 'u8[4096]{0}', space=vmem, size = 0x1000, scoped, tag = 'input window, operand 0, single buffered']
    #allocation3 [shape = 's32[1]{0}', space=sflag, size = 0x4, scoped, tag = 'scoped memory for tpu_custom_call.1']
    #allocation4 [shape = 's32[1]{0}', space=sflag, size = 0x4, scoped, tag = 'scoped memory for tpu_custom_call.1']
    #allocation5 [shape = 'u8[4096]{0}', space=vmem, size = 0x1000, scoped, tag = 'input window, operand 1, single buffered']
    #allocation6 [shape = 's32[1]{0}', space=sflag, size = 0x4, scoped, tag = 'scoped memory for tpu_custom_call.1']
    #allocation7 [shape = 'u8[512]{0}', space=smem, size = 0x200, scoped, tag = 'output window, operand 0, single buffered']
    %7 = vsyncpa [#allocation3], 0
    %8 = vsyncpa [#allocation6], 0
    %9 = vsyncpa [#allocation4], 0
    // Predicated region
    $region2: #{tpu_custom_call.1} parent=1 // pred_check
      _
    $region3: #{tpu_custom_call.1} parent=1 // pred_check_branch
      %11 = sbr.rel (0) target = $region5
    $region4: #{tpu_custom_call.1} parent=1 // pred_region
      %s13 = ssub.s32 128, 128
      %14 = vsyncadd [#allocation3], %s13
      %s16 = sshll.u32 [#allocation2], 4
      %s17 = int_to_ptr.vmem [resolvable:$true] %s16
      %19 = dma.hbm_to_vmem [thread:$0]  %s0, 128, %s17, [#allocation3]
    $region5: #{tpu_custom_call.1} parent=1 // pred_fallthru
      _
    // Predicated region
    $region6: #{tpu_custom_call.1} parent=1 // pred_check
      _
    $region7: #{tpu_custom_call.1} parent=1 // pred_check_branch
      %21 = sbr.rel (0) target = $region9
    $region8: #{tpu_custom_call.1} parent=1 // pred_region
      %s23 = ssub.s32 128, 128
      %24 = vsyncadd [#allocation6], %s23
      %s26 = sshll.u32 [#allocation5], 4
      %s27 = int_to_ptr.vmem [resolvable:$true] %s26
      %29 = dma.hbm_to_vmem [thread:$0]  %s1, 128, %s27, [#allocation6]
    $region9: #{tpu_custom_call.1} parent=1 // pred_fallthru
      _
    // Predicated region
    $region10: #{tpu_custom_call.1} parent=1 // pred_check
      _
    $region11: #{tpu_custom_call.1} parent=1 // pred_check_branch
      %31 = sbr.rel (0) target = $region13
    $region12: #{tpu_custom_call.1} parent=1 // pred_region
      %32 = dma.done [#allocation3], 128
    $region13: #{tpu_custom_call.1} parent=1 // pred_fallthru
      _
    // Predicated region
    $region14: #{tpu_custom_call.1} parent=1 // pred_check
      _
    $region15: #{tpu_custom_call.1} parent=1 // pred_check_branch
      %34 = sbr.rel (0) target = $region17
    $region16: #{tpu_custom_call.1} parent=1 // pred_region
      %35 = dma.done [#allocation6], 128
    $region17: #{tpu_custom_call.1} parent=1 // pred_fallthru
      _
    %v36 = vld [vmem:[#allocation2] sm:$0xff]
    %v37 = vld [vmem:[#allocation5] sm:$0xff]
    %vm38 = vcmask 130048
    %v39 = vsel %vm38, %v36, 0.0
    %v40 = vrot.slane %v39, 4
    %v41 = vadd.f32 %v39, %v40
    %v42 = vrot.slane %v41, 2
    %v43 = vadd.f32 %v41, %v42
    %v44 = vrot.slane %v43, 1
    %v45 = vadd.f32 %v43, %v44
    %vm46 = vcmask 122880
    %v47 = vsel %vm46, %v45, 0.0
    %48 = vadd.xlane.f32.xlu0 %v47
    %v49 = vpop.xlane.xlu0 %48
    %v50 = vrot.slane %v49, 4
    %v51 = vadd.f32 %v49, %v50
    %v52 = vrot.slane %v51, 2
    %v53 = vadd.f32 %v51, %v52
    %v54 = vrot.slane %v53, 1
    %v55 = vadd.f32 %v53, %v54
    %s56 = vtos %v55
    %v57 = vstv %s56
    %v58 = vrcp.pop %v57
    %v59 = vmul.f32 %v45, %v58
    %v60 = vlog2.pop %v59
    %v61 = vmul.f32 %v60, 0.6931472
    %v62 = vmul.f32 %v59, %v61
    %v63 = vsel %vm46, %v62, 0.0
    %64 = vadd.xlane.f32.xlu0 %v63
    %v65 = vpop.xlane.xlu0 %64
    %v66 = vrot.slane %v65, 4
    %v67 = vadd.f32 %v65, %v66
    %v68 = vrot.slane %v67, 2
    %v69 = vadd.f32 %v67, %v68
    %v70 = vrot.slane %v69, 1
    %v71 = vadd.f32 %v69, %v70
    %s72 = vtos %v71
    %s73 = sadd.f32 %s72, 2.7725887
    %v74 = vsel %vm38, %v37, 0.0
    %v75 = vrot.slane %v74, 4
    %v76 = vadd.f32 %v74, %v75
    %v77 = vrot.slane %v76, 2
    %v78 = vadd.f32 %v76, %v77
    %v79 = vrot.slane %v78, 1
    %v80 = vadd.f32 %v78, %v79
    %v81 = vsel %vm46, %v80, 0.0
    %82 = vadd.xlane.f32.xlu0 %v81
    %v83 = vpop.xlane.xlu0 %82
    %v84 = vrot.slane %v83, 4
    %v85 = vadd.f32 %v83, %v84
    %v86 = vrot.slane %v85, 2
    %v87 = vadd.f32 %v85, %v86
    %v88 = vrot.slane %v87, 1
    %v89 = vadd.f32 %v87, %v88
    %s90 = vtos %v89
    %v91 = vstv %s90
    %v92 = vrcp.pop %v91
    %v93 = vmul.f32 %v80, %v92
    %v94 = vlog2.pop %v93
    %v95 = vmul.f32 %v94, 0.6931472
    %v96 = vmul.f32 %v93, %v95
    %v97 = vsel %vm46, %v96, 0.0
    %98 = vadd.xlane.f32.xlu0 %v97
    %v99 = vpop.xlane.xlu0 %98
    %v100 = vrot.slane %v99, 4
    %v101 = vadd.f32 %v99, %v100
    %v102 = vrot.slane %v101, 2
    %v103 = vadd.f32 %v101, %v102
    %v104 = vrot.slane %v103, 1
    %v105 = vadd.f32 %v103, %v104
    %s106 = vtos %v105
    %s107 = sadd.f32 %s106, 2.7725887
    %v108 = vmul.f32 %v36, %v36
    %v109 = vsel %vm38, %v108, 0.0
    %v110 = vrot.slane %v109, 4
    %v111 = vadd.f32 %v109, %v110
    %v112 = vrot.slane %v111, 2
    %v113 = vadd.f32 %v111, %v112
    %v114 = vrot.slane %v113, 1
    %v115 = vadd.f32 %v113, %v114
    %v116 = vrsqrt.pop %v115
    %v117 = vmul.f32 %v115, %v116
    %vm118 = vcmp.eq.f32.partialorder %v115, inf
    %v119 = vsel %vm118, %v115, %v117
    %vm120 = vcmp.eq.f32.partialorder %v115, 0.0
    %v121 = vand.u32 %v115, 2147483648
    %v122 = vsel %vm120, %v121, %v119
    %v123 = vmax.f32 %v122, 1e-08
    %v124 = vrcp.pop %v123
    %v125 = vmul.f32 %v36, %v124
    %v126 = vmul.f32 %v37, %v37
    %v127 = vsel %vm38, %v126, 0.0
    %v128 = vrot.slane %v127, 4
    %v129 = vadd.f32 %v127, %v128
    %v130 = vrot.slane %v129, 2
    %v131 = vadd.f32 %v129, %v130
    %v132 = vrot.slane %v131, 1
    %v133 = vadd.f32 %v131, %v132
    %v134 = vrsqrt.pop %v133
    %v135 = vmul.f32 %v133, %v134
    %vm136 = vcmp.eq.f32.partialorder %v133, inf
    %v137 = vsel %vm136, %v133, %v135
    %vm138 = vcmp.eq.f32.partialorder %v133, 0.0
    %v139 = vand.u32 %v133, 2147483648
    %v140 = vsel %vm138, %v139, %v137
    %v141 = vmax.f32 %v140, 1e-08
    %v142 = vrcp.pop %v141
    %v143 = vmul.f32 %v37, %v142
    %v144 = vmul.f32 %v125, %v143
    %v145 = vsel %vm38, %v144, 0.0
    %146 = vadd.xlane.f32.xlu0 %v145
    %v147 = vpop.xlane.xlu0 %146
    %v148 = vrot.slane %v147, 4
    %v149 = vadd.f32 %v147, %v148
    %v150 = vrot.slane %v149, 2
    %v151 = vadd.f32 %v149, %v150
    %v152 = vrot.slane %v151, 1
    %v153 = vadd.f32 %v151, %v152
    %s154 = vtos %v153
    %s155 = smul.f32 %s154, 4.0
    %156 = vxpose.xlu0.b32.start [1/16] %v125, 128
    %157 = vxpose.xlu0.b32.cont [2/16] 0.0, 128
    %158 = vxpose.xlu0.b32.cont [3/16] 0.0, 128
    %159 = vxpose.xlu0.b32.cont [4/16] 0.0, 128
    %160 = vxpose.xlu0.b32.cont [5/16] 0.0, 128
    %161 = vxpose.xlu0.b32.cont [6/16] 0.0, 128
    %162 = vxpose.xlu0.b32.cont [7/16] 0.0, 128
    %163 = vxpose.xlu0.b32.cont [8/16] 0.0, 128
    %164 = vxpose.xlu0.b32.cont [9/16] 0.0, 128
    %165 = vxpose.xlu0.b32.cont [10/16] 0.0, 128
    %166 = vxpose.xlu0.b32.cont [11/16] 0.0, 128
    %167 = vxpose.xlu0.b32.cont [12/16] 0.0, 128
    %168 = vxpose.xlu0.b32.cont [13/16] 0.0, 128
    %169 = vxpose.xlu0.b32.cont [14/16] 0.0, 128
    %170 = vxpose.xlu0.b32.cont [15/16] 0.0, 128
    %171 = vxpose.xlu0.b32.end [16/16] 0.0, 128
    %v172 = vpop.trf.xlu0
    %v173 = vpop.trf.xlu0
    %v174 = vpop.trf.xlu0
    %v175 = vpop.trf.xlu0
    %v176 = vpop.trf.xlu0
    %v177 = vpop.trf.xlu0
    %v178 = vpop.trf.xlu0
    %v179 = vpop.trf.xlu0
    %v180 = vpop.trf.xlu0
    %v181 = vpop.trf.xlu0
    %v182 = vpop.trf.xlu0
    %v183 = vpop.trf.xlu0
    %v184 = vpop.trf.xlu0
    %v185 = vpop.trf.xlu0
    %v186 = vpop.trf.xlu0
    %v187 = vpop.trf.xlu0
    %vm188 = vcmask 64512
    %v190 = vsel %vm188, %v172, 0
    %v193 = vsel %vm188, %v173, 0
    %195 = vmatprep.subr.mxu0 0.0
    %196 = vmatpush1.msra.mxu0 0.0
    %197 = vmatprep.subr.mxu0 0.0
    %198 = vmatpush1.msra.mxu0 0.0
    %199 = vmatprep.subr.mxu0 0.0
    %200 = vmatpush1.msra.mxu0 0.0
    %201 = vmatprep.subr.mxu0 0.0
    %202 = vmatpush1.msra.mxu0 0.0
    %203 = vmatprep.subr.mxu0 0.0
    %204 = vmatpush1.msra.mxu0 0.0
    %205 = vmatprep.subr.mxu0 0.0
    %206 = vmatpush1.msra.mxu0 0.0
    %207 = vmatprep.subr.mxu0 0.0
    %208 = vmatpush1.msra.mxu0 0.0
    %209 = vmatprep.subr.mxu0 0.0
    %210 = vmatpush1.msra.mxu0 0.0
    %211 = vmatprep.subr.mxu0 0.0
    %212 = vmatpush1.msra.mxu0 0.0
    %213 = vmatprep.subr.mxu0 0.0
    %214 = vmatpush1.msra.mxu0 0.0
    %215 = vmatprep.subr.mxu0 0.0
    %216 = vmatpush1.msra.mxu0 0.0
    %217 = vmatprep.subr.mxu0 0.0
    %218 = vmatpush1.msra.mxu0 0.0
    %219 = vmatprep.subr.mxu0 0.0
    %220 = vmatpush1.msra.mxu0 0.0
    %221 = vmatprep.subr.mxu0 0.0
    %222 = vmatpush1.msra.mxu0 0.0
    %223 = vmatprep.subr.mxu0 0.0
    %224 = vmatpush1.msra.mxu0 0.0
    %225 = vmatprep.subr.mxu0 0.0
    %226 = vmatpush1.msra.mxu0 %v125
    %227 = vmatprep.subr.mxu0 0.0
    %228 = vmatpush2.msra.mxu0 0.0
    %229 = vmatprep.subr.mxu0 0.0
    %230 = vmatpush2.msra.mxu0 0.0
    %231 = vmatprep.subr.mxu0 0.0
    %232 = vmatpush2.msra.mxu0 0.0
    %233 = vmatprep.subr.mxu0 0.0
    %234 = vmatpush2.msra.mxu0 0.0
    %235 = vmatprep.subr.mxu0 0.0
    %236 = vmatpush2.msra.mxu0 0.0
    %237 = vmatprep.subr.mxu0 0.0
    %238 = vmatpush2.msra.mxu0 0.0
    %239 = vmatprep.subr.mxu0 0.0
    %240 = vmatpush2.msra.mxu0 0.0
    %241 = vmatprep.subr.mxu0 0.0
    %242 = vmatpush2.msra.mxu0 0.0
    %243 = vmatprep.subr.mxu0 0.0
    %244 = vmatpush2.msra.mxu0 0.0
    %245 = vmatprep.subr.mxu0 0.0
    %246 = vmatpush2.msra.mxu0 0.0
    %247 = vmatprep.subr.mxu0 0.0
    %248 = vmatpush2.msra.mxu0 0.0
    %249 = vmatprep.subr.mxu0 0.0
    %250 = vmatpush2.msra.mxu0 0.0
    %251 = vmatprep.subr.mxu0 0.0
    %252 = vmatpush2.msra.mxu0 0.0
    %253 = vmatprep.subr.mxu0 0.0
    %254 = vmatpush2.msra.mxu0 0.0
    %255 = vmatprep.subr.mxu0 0.0
    %256 = vmatpush2.msra.mxu0 0.0
    %257 = vmatprep.subr.mxu0 0.0
    %258 = vmatpush2.msra.mxu0 0.0
    %259 = vmatprep.mubr.f32.mxu0 0.0
    %260 = vmatmul.mubr.f32.gmra.mxu0 %v190
    %v261 = vpop.f32.mrf.mxu0
    %v262 = vadd.f32 0.0, %v261
    %v263 = vpop.f32.mrf.mxu0
    %264 = vmatprep.mubr.f32.mxu0 0.0
    %265 = vmatmul.mubr.f32.gmra.mxu0 %v193
    %v266 = vpop.f32.mrf.mxu0
    %v267 = vadd.f32 0.0, %v266
    %v268 = vpop.f32.mrf.mxu0
    %269 = vdwg.mxu0
    %v270 = vmul.f32 %v262, 2.0
    %v271 = vmul.f32 %v267, 2.0
    %272 = vmatprep.subr.mxu0 0.0
    %273 = vmatpush1.msra.mxu0 0.0
    %274 = vmatprep.subr.mxu0 0.0
    %275 = vmatpush1.msra.mxu0 0.0
    %276 = vmatprep.subr.mxu0 0.0
    %277 = vmatpush1.msra.mxu0 0.0
    %278 = vmatprep.subr.mxu0 0.0
    %279 = vmatpush1.msra.mxu0 0.0
    %280 = vmatprep.subr.mxu0 0.0
    %281 = vmatpush1.msra.mxu0 0.0
    %282 = vmatprep.subr.mxu0 0.0
    %283 = vmatpush1.msra.mxu0 0.0
    %284 = vmatprep.subr.mxu0 0.0
    %285 = vmatpush1.msra.mxu0 0.0
    %286 = vmatprep.subr.mxu0 0.0
    %287 = vmatpush1.msra.mxu0 0.0
    %288 = vmatprep.subr.mxu0 0.0
    %289 = vmatpush1.msra.mxu0 0.0
    %290 = vmatprep.subr.mxu0 0.0
    %291 = vmatpush1.msra.mxu0 0.0
    %292 = vmatprep.subr.mxu0 0.0
    %293 = vmatpush1.msra.mxu0 0.0
    %294 = vmatprep.subr.mxu0 0.0
    %295 = vmatpush1.msra.mxu0 0.0
    %296 = vmatprep.subr.mxu0 0.0
    %297 = vmatpush1.msra.mxu0 0.0
    %298 = vmatprep.subr.mxu0 0.0
    %299 = vmatpush1.msra.mxu0 0.0
    %300 = vmatprep.subr.mxu0 0.0
    %301 = vmatpush1.msra.mxu0 0.0
    %302 = vmatprep.subr.mxu0 0.0
    %303 = vmatpush1.msra.mxu0 %v143
    %304 = vmatprep.subr.mxu0 0.0
    %305 = vmatpush2.msra.mxu0 0.0
    %306 = vmatprep.subr.mxu0 0.0
    %307 = vmatpush2.msra.mxu0 0.0
    %308 = vmatprep.subr.mxu0 0.0
    %309 = vmatpush2.msra.mxu0 0.0
    %310 = vmatprep.subr.mxu0 0.0
    %311 = vmatpush2.msra.mxu0 0.0
    %312 = vmatprep.subr.mxu0 0.0
    %313 = vmatpush2.msra.mxu0 0.0
    %314 = vmatprep.subr.mxu0 0.0
    %315 = vmatpush2.msra.mxu0 0.0
    %316 = vmatprep.subr.mxu0 0.0
    %317 = vmatpush2.msra.mxu0 0.0
    %318 = vmatprep.subr.mxu0 0.0
    %319 = vmatpush2.msra.mxu0 0.0
    %320 = vmatprep.subr.mxu0 0.0
    %321 = vmatpush2.msra.mxu0 0.0
    %322 = vmatprep.subr.mxu0 0.0
    %323 = vmatpush2.msra.mxu0 0.0
    %324 = vmatprep.subr.mxu0 0.0
    %325 = vmatpush2.msra.mxu0 0.0
    %326 = vmatprep.subr.mxu0 0.0
    %327 = vmatpush2.msra.mxu0 0.0
    %328 = vmatprep.subr.mxu0 0.0
    %329 = vmatpush2.msra.mxu0 0.0
    %330 = vmatprep.subr.mxu0 0.0
    %331 = vmatpush2.msra.mxu0 0.0
    %332 = vmatprep.subr.mxu0 0.0
    %333 = vmatpush2.msra.mxu0 0.0
    %334 = vmatprep.subr.mxu0 0.0
    %335 = vmatpush2.msra.mxu0 0.0
    %336 = vmatprep.mubr.f32.mxu0 0.0
    %337 = vmatmul.mubr.f32.gmra.mxu0 %v190
    %v338 = vpop.f32.mrf.mxu0
    %v339 = vadd.f32 0.0, %v338
    %v340 = vpop.f32.mrf.mxu0
    %341 = vmatprep.mubr.f32.mxu0 0.0
    %342 = vmatmul.mubr.f32.gmra.mxu0 %v193
    %v343 = vpop.f32.mrf.mxu0
    %v344 = vadd.f32 0.0, %v343
    %v345 = vpop.f32.mrf.mxu0
    %346 = vdwg.mxu0
    %v347 = vmul.f32 %v339, 2.0
    %v348 = vmul.f32 %v344, 2.0
    %349 = vxpose.xlu0.b32.start [1/16] %v143, 128
    %350 = vxpose.xlu0.b32.cont [2/16] 0.0, 128
    %351 = vxpose.xlu0.b32.cont [3/16] 0.0, 128
    %352 = vxpose.xlu0.b32.cont [4/16] 0.0, 128
    %353 = vxpose.xlu0.b32.cont [5/16] 0.0, 128
    %354 = vxpose.xlu0.b32.cont [6/16] 0.0, 128
    %355 = vxpose.xlu0.b32.cont [7/16] 0.0, 128
    %356 = vxpose.xlu0.b32.cont [8/16] 0.0, 128
    %357 = vxpose.xlu0.b32.cont [9/16] 0.0, 128
    %358 = vxpose.xlu0.b32.cont [10/16] 0.0, 128
    %359 = vxpose.xlu0.b32.cont [11/16] 0.0, 128
    %360 = vxpose.xlu0.b32.cont [12/16] 0.0, 128
    %361 = vxpose.xlu0.b32.cont [13/16] 0.0, 128
    %362 = vxpose.xlu0.b32.cont [14/16] 0.0, 128
    %363 = vxpose.xlu0.b32.cont [15/16] 0.0, 128
    %364 = vxpose.xlu0.b32.end [16/16] 0.0, 128
    %v365 = vpop.trf.xlu0
    %v366 = vpop.trf.xlu0
    %v367 = vpop.trf.xlu0
    %v368 = vpop.trf.xlu0
    %v369 = vpop.trf.xlu0
    %v370 = vpop.trf.xlu0
    %v371 = vpop.trf.xlu0
    %v372 = vpop.trf.xlu0
    %v373 = vpop.trf.xlu0
    %v374 = vpop.trf.xlu0
    %v375 = vpop.trf.xlu0
    %v376 = vpop.trf.xlu0
    %v377 = vpop.trf.xlu0
    %v378 = vpop.trf.xlu0
    %v379 = vpop.trf.xlu0
    %v380 = vpop.trf.xlu0
    %v382 = vsel %vm188, %v365, 0
    %v385 = vsel %vm188, %v366, 0
    %387 = vmatprep.subr.mxu0 0.0
    %388 = vmatpush1.msra.mxu0 0.0
    %389 = vmatprep.subr.mxu0 0.0
    %390 = vmatpush1.msra.mxu0 0.0
    %391 = vmatprep.subr.mxu0 0.0
    %392 = vmatpush1.msra.mxu0 0.0
    %393 = vmatprep.subr.mxu0 0.0
    %394 = vmatpush1.msra.mxu0 0.0
    %395 = vmatprep.subr.mxu0 0.0
    %396 = vmatpush1.msra.mxu0 0.0
    %397 = vmatprep.subr.mxu0 0.0
    %398 = vmatpush1.msra.mxu0 0.0
    %399 = vmatprep.subr.mxu0 0.0
    %400 = vmatpush1.msra.mxu0 0.0
    %401 = vmatprep.subr.mxu0 0.0
    %402 = vmatpush1.msra.mxu0 0.0
    %403 = vmatprep.subr.mxu0 0.0
    %404 = vmatpush1.msra.mxu0 0.0
    %405 = vmatprep.subr.mxu0 0.0
    %406 = vmatpush1.msra.mxu0 0.0
    %407 = vmatprep.subr.mxu0 0.0
    %408 = vmatpush1.msra.mxu0 0.0
    %409 = vmatprep.subr.mxu0 0.0
    %410 = vmatpush1.msra.mxu0 0.0
    %411 = vmatprep.subr.mxu0 0.0
    %412 = vmatpush1.msra.mxu0 0.0
    %413 = vmatprep.subr.mxu0 0.0
    %414 = vmatpush1.msra.mxu0 0.0
    %415 = vmatprep.subr.mxu0 0.0
    %416 = vmatpush1.msra.mxu0 0.0
    %417 = vmatprep.subr.mxu0 0.0
    %418 = vmatpush1.msra.mxu0 %v143
    %419 = vmatprep.subr.mxu0 0.0
    %420 = vmatpush2.msra.mxu0 0.0
    %421 = vmatprep.subr.mxu0 0.0
    %422 = vmatpush2.msra.mxu0 0.0
    %423 = vmatprep.subr.mxu0 0.0
    %424 = vmatpush2.msra.mxu0 0.0
    %425 = vmatprep.subr.mxu0 0.0
    %426 = vmatpush2.msra.mxu0 0.0
    %427 = vmatprep.subr.mxu0 0.0
    %428 = vmatpush2.msra.mxu0 0.0
    %429 = vmatprep.subr.mxu0 0.0
    %430 = vmatpush2.msra.mxu0 0.0
    %431 = vmatprep.subr.mxu0 0.0
    %432 = vmatpush2.msra.mxu0 0.0
    %433 = vmatprep.subr.mxu0 0.0
    %434 = vmatpush2.msra.mxu0 0.0
    %435 = vmatprep.subr.mxu0 0.0
    %436 = vmatpush2.msra.mxu0 0.0
    %437 = vmatprep.subr.mxu0 0.0
    %438 = vmatpush2.msra.mxu0 0.0
    %439 = vmatprep.subr.mxu0 0.0
    %440 = vmatpush2.msra.mxu0 0.0
    %441 = vmatprep.subr.mxu0 0.0
    %442 = vmatpush2.msra.mxu0 0.0
    %443 = vmatprep.subr.mxu0 0.0
    %444 = vmatpush2.msra.mxu0 0.0
    %445 = vmatprep.subr.mxu0 0.0
    %446 = vmatpush2.msra.mxu0 0.0
    %447 = vmatprep.subr.mxu0 0.0
    %448 = vmatpush2.msra.mxu0 0.0
    %449 = vmatprep.subr.mxu0 0.0
    %450 = vmatpush2.msra.mxu0 0.0
    %451 = vmatprep.mubr.f32.mxu0 0.0
    %452 = vmatmul.mubr.f32.gmra.mxu0 %v382
    %v453 = vpop.f32.mrf.mxu0
    %v454 = vadd.f32 0.0, %v453
    %v455 = vpop.f32.mrf.mxu0
    %456 = vmatprep.mubr.f32.mxu0 0.0
    %457 = vmatmul.mubr.f32.gmra.mxu0 %v385
    %v458 = vpop.f32.mrf.mxu0
    %v459 = vadd.f32 0.0, %v458
    %v460 = vpop.f32.mrf.mxu0
    %461 = vdwg.mxu0
    %v462 = vmul.f32 %v454, 2.0
    %v463 = vmul.f32 %v459, 2.0
    %v464 = vlaneseq
    %v465 = vshrl.u32 %v464, 7
    %v466 = vadd.s32 %v465, 8
    %v467 = vlaneseq
    %v468 = vand.u32 %v467, 127
    %vm469 = vcmp.eq.s32.totalorder %v465, %v468
    %vm470 = vcmp.eq.s32.totalorder %v466, %v468
    %v471 = vsub.f32 %v270, 2.0
    %v472 = vsub.f32 %v271, 2.0
    %v473 = vmul.f32 %v471, 1.442695
    %v474 = vpow.pop %v473
    %v475 = vmul.f32 %v472, 1.442695
    %v476 = vpow.pop %v475
    %v477 = vsel %vm469, 0.0, %v474
    %v478 = vsel %vm470, 0.0, %v476
    %v479 = vsub.f32 %v347, 2.0
    %v480 = vsub.f32 %v348, 2.0
    %v481 = vmul.f32 %v479, 1.442695
    %v482 = vpow.pop %v481
    %v483 = vmul.f32 %v480, 1.442695
    %v484 = vpow.pop %v483
    %v485 = vsub.f32 %v462, 2.0
    %v486 = vsub.f32 %v463, 2.0
    %v487 = vmul.f32 %v485, 1.442695
    %v488 = vpow.pop %v487
    %v489 = vmul.f32 %v486, 1.442695
    %v490 = vpow.pop %v489
    %v491 = vsel %vm469, 0.0, %v488
    %v492 = vsel %vm470, 0.0, %v490
    %v493 = vsel %vm38, %v477, 0.0
    %494 = vadd.xlane.f32.xlu0 %v493
    %v495 = vpop.xlane.xlu0 %494
    %v496 = vsel %vm38, %v478, 0.0
    %497 = vadd.xlane.f32.xlu0 %v496
    %v498 = vpop.xlane.xlu0 %497
    %v499 = vsel %vm38, %v482, 0.0
    %500 = vadd.xlane.f32.xlu0 %v499
    %v501 = vpop.xlane.xlu0 %500
    %v502 = vsel %vm38, %v484, 0.0
    %503 = vadd.xlane.f32.xlu0 %v502
    %v504 = vpop.xlane.xlu0 %503
    %v505 = vadd.f32 %v495, %v501
    %v506 = vadd.f32 %v498, %v504
    %v507 = vadd.f32 %v499, %v502
    %v508 = vrot.slane %v507, 4
    %v509 = vadd.f32 %v507, %v508
    %v510 = vrot.slane %v509, 2
    %v511 = vadd.f32 %v509, %v510
    %v512 = vrot.slane %v511, 1
    %v513 = vadd.f32 %v511, %v512
    %v514 = vsel %vm38, %v491, 0.0
    %v515 = vsel %vm38, %v492, 0.0
    %v516 = vadd.f32 %v514, %v515
    %v517 = vrot.slane %v516, 4
    %v518 = vadd.f32 %v516, %v517
    %v519 = vrot.slane %v518, 2
    %v520 = vadd.f32 %v518, %v519
    %v521 = vrot.slane %v520, 1
    %v522 = vadd.f32 %v520, %v521
    %v523 = vadd.f32 %v513, %v522
    %v524 = vlog2.pop %v505
    %v525 = vmul.f32 %v524, 0.6931472
    %v526 = vlog2.pop %v506
    %v527 = vmul.f32 %v526, 0.6931472
    %vm528 = vcmask 7168
    %v529 = vsel %vm528, %v525, 0.0
    %v530 = vsel %vm528, %v527, 0.0
    %v531 = vadd.f32 %v529, %v530
    %532 = vadd.xlane.f32.xlu0 %v531
    %v533 = vpop.xlane.xlu0 %532
    %v534 = vrot.slane %v533, 4
    %v535 = vadd.f32 %v533, %v534
    %v536 = vrot.slane %v535, 2
    %v537 = vadd.f32 %v535, %v536
    %v538 = vrot.slane %v537, 1
    %v539 = vadd.f32 %v537, %v538
    %s540 = vtos %v539
    %s541 = sadd.f32 %s540, 64.0
    %v542 = vlog2.pop %v523
    %v543 = vmul.f32 %v542, 0.6931472
    %v544 = vsel %vm46, %v543, 0.0
    %545 = vadd.xlane.f32.xlu0 %v544
    %v546 = vpop.xlane.xlu0 %545
    %v547 = vrot.slane %v546, 4
    %v548 = vadd.f32 %v546, %v547
    %v549 = vrot.slane %v548, 2
    %v550 = vadd.f32 %v548, %v549
    %v551 = vrot.slane %v550, 1
    %v552 = vadd.f32 %v550, %v551
    %s553 = vtos %v552
    %s554 = sadd.f32 %s541, %s553
    %s555 = ssub.f32 %s554, %s155
    %v556 = vrcp.pop 32.0
    %s557 = vtos %v556
    %s558 = smul.f32 %s555, %s557
    %s559 = sadd.f32 %s558, %s73
    %s560 = sadd.f32 %s559, %s107
    %s561 = scalar_lea.smem [#allocation7], 0
    %562 = sst [smem:[%s561]] %s560
    // Predicated region
    $region18: #{tpu_custom_call.1} parent=1 // pred_check
      _
    $region19: #{tpu_custom_call.1} parent=1 // pred_check_branch
      %564 = sbr.rel (0) target = $region21
    $region20: #{tpu_custom_call.1} parent=1 // pred_region
      %s566 = ssub.s32 16, 16
      %567 = vsyncadd [#allocation4], %s566
      %570 = dma.smem_to_hbm [#allocation7], 16, %s2, [#allocation4]
    $region21: #{tpu_custom_call.1} parent=1 // pred_fallthru
      _
    // Predicated region
    $region22: #{tpu_custom_call.1} parent=1 // pred_check
      _
    $region23: #{tpu_custom_call.1} parent=1 // pred_check_branch
      %572 = sbr.rel (0) target = $region25
    $region24: #{tpu_custom_call.1} parent=1 // pred_region
      %573 = dma.done [#allocation4], 16
    $region25: #{tpu_custom_call.1} parent=1 // pred_fallthru
      _
    %574 = sfence
    %575 = vsyncpa [#allocation3], 1
    %576 = vsyncpa [#allocation6], 1
    %577 = vsyncpa [#allocation4], 1

</llo_original>
